<compile_context>
chip_gen: v6e
topology: v6e:2x2x1
jax: 0.10.0
libtpu: 0.0.40
codegen_flags: <defaults>
</compile_context>

<pallas_src>
import functools

import jax
import jax.numpy as jnp
import numpy as np
from jax.experimental import pallas as pl
from jax.experimental.pallas import tpu as pltpu

HIDDEN = 128   # hidden width fixed by the PyTorch module
LANE = 128     # TPU lane width


def _round_up(x, m):
    return (x + m - 1) // m * m


def _cdiv(a, b):
    return -(-a // b)


def _choose_batch_tile(B, batch_tile):
    """Pick (tile rows, grid steps, padded batch).

    - Rounds/validates batch_tile to a multiple of 16 (bf16 sublane packing;
      also satisfies the 8-sublane rule for the f32 output block).
    - Splits B so per-step padding waste is <= 15 rows.
    - For v7x megacore, forces >= 2 grid steps once the batch is big enough
      so dimension_semantics=("parallel",) can use both TensorCores.
    """
    batch_tile = max(16, _round_up(int(batch_tile), 16))
    min_steps = 2 if B >= 128 else 1
    n_steps = max(_cdiv(B, batch_tile), min_steps)
    tb = _round_up(_cdiv(B, n_steps), 16)        # tb <= batch_tile
    return tb, n_steps, tb * n_steps


def dqn_kernel(x_ref, w_ref, b_ref, o_ref, *, input_size, in_k):
    """One batch tile of the 3-layer MLP.

    x_ref: (TB, input_size)       f32 (natural feature width, cast here)
    w_ref: (in_k + 2*128, 128)    bf16, rows = [w1_pad ; w2 ; w3_pad]
    b_ref: (3, 128)               f32,  rows = [b1 ; b2 ; b3_pad(-1e30)]
    o_ref: (TB, 128)              f32 (lane-dense padded output head)
    """
    x = x_ref[...].astype(jnp.bfloat16)               # (TB, input_size)

    # Static slices of the packed weight buffer are free (no data movement).
    # w2/w3 start at 16-aligned row offsets (in_k is a multiple of 16).
    w1 = w_ref[0:input_size, :]
    w2 = w_ref[in_k:in_k + HIDDEN, :]
    w3 = w_ref[in_k + HIDDEN:in_k + 2 * HIDDEN, :]

    b = b_ref[...]                                     # (3, 128) f32
    b1 = b[0:1, :]
    b2 = b[1:2, :]
    b3 = b[2:3, :]

    # fc1 + ReLU: bf16 MXU inputs, f32 accumulation, f32 elementwise.
    h1 = jnp.dot(x, w1, preferred_element_type=jnp.float32)
    h1 = jnp.maximum(h1 + b1, 0.0)
    # fc2 + ReLU
    h2 = jnp.dot(h1.astype(jnp.bfloat16), w2, preferred_element_type=jnp.float32)
    h2 = jnp.maximum(h2 + b2, 0.0)
    # fc3 (output head, no activation) -> lane-dense 128-wide store.
    out = jnp.dot(h2.astype(jnp.bfloat16), w3, preferred_element_type=jnp.float32)
    o_ref[...] = out + b3


def pack_dqn_params(params, input_size, output_size):
    """Pack (w1,b1,w2,b2,w3,b3) into one bf16 weight slab and one f32 bias slab."""
    w1, b1, w2, b2, w3, b3 = params
    assert HIDDEN == LANE
    in_k = max(_round_up(input_size, 16), 16)          # align w2/w3 row offsets
    out_p = _round_up(output_size, LANE)
    # TODO(synk): packing assumes output_size <= 128 (single lane block for w3).
    assert out_p == LANE, "output head wider than 128 not supported by packing"

    w1_p = jnp.zeros((in_k, HIDDEN), jnp.float32).at[:input_size, :].set(w1)
    w3_p = jnp.zeros((HIDDEN, out_p), jnp.float32).at[:, :output_size].set(w3)
    w_all = jnp.concatenate([w1_p, w2, w3_p], axis=0).astype(jnp.bfloat16)

    # Padded head lanes get a large negative bias so the padded 128-wide head
    # is argmax-safe without the trailing slice pass.
    b3_p = jnp.full((1, out_p), -1e30, jnp.float32).at[:, :output_size].set(b3)
    b_all = jnp.concatenate([b1, b2, b3_p], axis=0).astype(jnp.float32)  # (3,128)
    return w_all, b_all


@functools.partial(jax.jit,
                   static_argnames=("input_size", "output_size",
                                    "batch_tile", "padded_output"))
def dqn_forward(x, w_all, b_all, *, input_size, output_size,
                batch_tile=1024, padded_output=False):
    # NOTE: tb depends on B, so each distinct batch size recompiles; bucket
    # batch sizes in the RL loop if they vary.
    B = x.shape[0]
    in_k = w_all.shape[0] - 2 * HIDDEN
    out_p = w_all.shape[1]

    tb, n_steps, b_p = _choose_batch_tile(B, batch_tile)

    # Only a batch-dim pad (and only when needed); feature dim stays at its
    # natural width and the bf16 cast happens inside the kernel.
    if b_p != B:
        x = jnp.pad(x, ((0, b_p - B), (0, 0)))

    flops = 2 * b_p * (input_size * HIDDEN + HIDDEN * HIDDEN + HIDDEN * out_p)
    bytes_accessed = (x.size * x.dtype.itemsize + w_all.size * 2
                      + b_all.size * 4 + b_p * out_p * 4)

    out = pl.pallas_call(
        functools.partial(dqn_kernel, input_size=input_size, in_k=in_k),
        out_shape=jax.ShapeDtypeStruct((b_p, out_p), jnp.float32),
        grid_spec=pltpu.PrefetchScalarGridSpec(
            num_scalar_prefetch=0,
            grid=(n_steps,),
            in_specs=[
                # x: last block dim == full array dim (legal below 128 lanes).
                pl.BlockSpec((tb, input_size), lambda i: (i, 0)),
                # Constant index maps: weights/biases DMA'd once, VMEM-resident.
                pl.BlockSpec(w_all.shape, lambda i: (0, 0)),
                pl.BlockSpec(b_all.shape, lambda i: (0, 0)),
            ],
            out_specs=pl.BlockSpec((tb, out_p), lambda i: (i, 0)),
        ),
        compiler_params=pltpu.CompilerParams(
            dimension_semantics=("parallel",)),
        cost_estimate=pl.CostEstimate(
            flops=flops, transcendentals=0, bytes_accessed=bytes_accessed),
    )(x, w_all, b_all)

    if padded_output:
        # (b_p, 128): padded lanes hold ~-1e30 (argmax-safe), padded rows are
        # garbage — fast path that skips the extra HBM slice pass.
        return out
    return out[:B, :output_size]


def init_dqn_params(key, input_size, output_size, hidden=HIDDEN):
    """Deterministic init mimicking torch.nn.Linear (U(-1/sqrt(fan_in), +1/sqrt(fan_in)))."""
    keys = jax.random.split(key, 6)

    def linear(kw, kb, fan_in, fan_out):
        bound = 1.0 / np.sqrt(fan_in)
        w = jax.random.uniform(kw, (fan_in, fan_out), jnp.float32, -bound, bound)
        b = jax.random.uniform(kb, (1, fan_out), jnp.float32, -bound, bound)
        return w, b

    w1, b1 = linear(keys[0], keys[1], input_size, hidden)
    w2, b2 = linear(keys[2], keys[3], hidden, hidden)
    w3, b3 = linear(keys[4], keys[5], hidden, output_size)
    return (w1, b1, w2, b2, w3, b3)


def dqn_reference(x, params):
    """Same math as the kernel (bf16 MXU inputs, f32 accumulation)."""
    w1, b1, w2, b2, w3, b3 = params
    xb = x.astype(jnp.bfloat16)
    h1 = jnp.dot(xb, w1.astype(jnp.bfloat16),
                 preferred_element_type=jnp.float32) + b1
    h1 = jnp.maximum(h1, 0.0)
    h2 = jnp.dot(h1.astype(jnp.bfloat16), w2.astype(jnp.bfloat16),
                 preferred_element_type=jnp.float32) + b2
    h2 = jnp.maximum(h2, 0.0)
    return jnp.dot(h2.astype(jnp.bfloat16), w3.astype(jnp.bfloat16),
                   preferred_element_type=jnp.float32) + b3


if __name__ == "__main__":
    key = jax.random.PRNGKey(0)
    k_params, k_x = jax.random.split(key)

    batch = 8          # small demo shape; wrapper scales to replay minibatches
    input_size = 32
    output_size = 8

    params = init_dqn_params(k_params, input_size, output_size)
    x = jax.random.normal(k_x, (batch, input_size), dtype=jnp.float32)

    w_all, b_all = pack_dqn_params(params, input_size, output_size)
    out = dqn_forward(x, w_all, b_all,
                      input_size=input_size, output_size=output_size)
    out = jax.block_until_ready(out)

    ref = dqn_reference(x, params)
    np.testing.assert_allclose(np.asarray(out), np.asarray(ref),
                               rtol=1e-3, atol=1e-3)

    # Fast path: padded 128-wide head must be argmax-safe (padded lanes ~ -1e30).
    out_pad = dqn_forward(x, w_all, b_all,
                          input_size=input_size, output_size=output_size,
                          padded_output=True)
    out_pad = jax.block_until_ready(out_pad)
    np.testing.assert_array_equal(
        np.argmax(np.asarray(out_pad)[:batch], axis=-1),
        np.argmax(np.asarray(ref), axis=-1))

    print("KERNEL_OK")
</pallas_src>

<mosaic_0001>
module attributes {stable_mosaic.version = 11 : i64} {
  func.func @dqn_kernel(%arg0: i32, %arg1: memref<16x32xf32, #tpu.memory_space<vmem>>, %arg2: memref<288x128xbf16, #tpu.memory_space<vmem>>, %arg3: memref<3x128xf32, #tpu.memory_space<vmem>>, %arg4: memref<16x128xf32, #tpu.memory_space<vmem>>) attributes {dimension_semantics = [#tpu.dimension_semantics<parallel>], iteration_bounds = array<i64: 1>, scalar_prefetch = 0 : i64, scratch_operands = 0 : i64, tpu.core_type = #tpu.core_type<tc>, window_params = [{transform_indices = @transform_0, window_bounds = array<i64: 16, 32>}, {pipeline_mode = #tpu.pipeline_mode<synchronous>, transform_indices = @transform_1, window_bounds = array<i64: 288, 128>}, {pipeline_mode = #tpu.pipeline_mode<synchronous>, transform_indices = @transform_2, window_bounds = array<i64: 3, 128>}, {transform_indices = @transform_3, window_bounds = array<i64: 16, 128>}]} {
    %c0 = arith.constant 0 : index
    %c0_0 = arith.constant 0 : index
    %0 = vector.load %arg1[%c0, %c0_0] : memref<16x32xf32, #tpu.memory_space<vmem>>, vector<16x32xf32>
    %1 = arith.truncf %0 : vector<16x32xf32> to vector<16x32xbf16>
    %c0_1 = arith.constant 0 : index
    %c0_2 = arith.constant 0 : index
    %2 = vector.load %arg2[%c0_1, %c0_2] : memref<288x128xbf16, #tpu.memory_space<vmem>>, vector<32x128xbf16>
    %c32 = arith.constant 32 : index
    %c0_3 = arith.constant 0 : index
    %3 = vector.load %arg2[%c32, %c0_3] : memref<288x128xbf16, #tpu.memory_space<vmem>>, vector<128x128xbf16>
    %c160 = arith.constant 160 : index
    %c0_4 = arith.constant 0 : index
    %4 = vector.load %arg2[%c160, %c0_4] : memref<288x128xbf16, #tpu.memory_space<vmem>>, vector<128x128xbf16>
    %c0_5 = arith.constant 0 : index
    %c0_6 = arith.constant 0 : index
    %5 = vector.load %arg3[%c0_5, %c0_6] : memref<3x128xf32, #tpu.memory_space<vmem>>, vector<3x128xf32>
    %6 = vector.extract_strided_slice %5 {offsets = [0, 0], sizes = [1, 128], strides = [1, 1]} : vector<3x128xf32> to vector<1x128xf32>
    %7 = vector.extract_strided_slice %5 {offsets = [1, 0], sizes = [1, 128], strides = [1, 1]} : vector<3x128xf32> to vector<1x128xf32>
    %8 = vector.extract_strided_slice %5 {offsets = [2, 0], sizes = [1, 128], strides = [1, 1]} : vector<3x128xf32> to vector<1x128xf32>
    %cst = arith.constant dense<0.000000e+00> : vector<16x128xf32>
    %9 = tpu.matmul %1, %2, %cst {dimension_numbers = #tpu.dot_dimension_numbers<[1], [0], [0], [1], [0, 0, 1, 1], [], []>} : vector<16x32xbf16>, vector<32x128xbf16>, vector<16x128xf32> -> vector<16x128xf32>
    %10 = vector.broadcast %6 : vector<1x128xf32> to vector<16x128xf32>
    %11 = arith.addf %9, %10 : vector<16x128xf32>
    %cst_7 = arith.constant 0.000000e+00 : f32
    %12 = vector.broadcast %cst_7 : f32 to vector<16x128xf32>
    %13 = arith.maximumf %11, %12 : vector<16x128xf32>
    %14 = arith.truncf %13 : vector<16x128xf32> to vector<16x128xbf16>
    %cst_8 = arith.constant dense<0.000000e+00> : vector<16x128xf32>
    %15 = tpu.matmul %14, %3, %cst_8 {dimension_numbers = #tpu.dot_dimension_numbers<[1], [0], [0], [1], [0, 0, 1, 1], [], []>} : vector<16x128xbf16>, vector<128x128xbf16>, vector<16x128xf32> -> vector<16x128xf32>
    %16 = vector.broadcast %7 : vector<1x128xf32> to vector<16x128xf32>
    %17 = arith.addf %15, %16 : vector<16x128xf32>
    %cst_9 = arith.constant 0.000000e+00 : f32
    %18 = vector.broadcast %cst_9 : f32 to vector<16x128xf32>
    %19 = arith.maximumf %17, %18 : vector<16x128xf32>
    %20 = arith.truncf %19 : vector<16x128xf32> to vector<16x128xbf16>
    %cst_10 = arith.constant dense<0.000000e+00> : vector<16x128xf32>
    %21 = tpu.matmul %20, %4, %cst_10 {dimension_numbers = #tpu.dot_dimension_numbers<[1], [0], [0], [1], [0, 0, 1, 1], [], []>} : vector<16x128xbf16>, vector<128x128xbf16>, vector<16x128xf32> -> vector<16x128xf32>
    %22 = vector.broadcast %8 : vector<1x128xf32> to vector<16x128xf32>
    %23 = arith.addf %21, %22 : vector<16x128xf32>
    %c0_11 = arith.constant 0 : index
    %c0_12 = arith.constant 0 : index
    %24 = vector.load %arg4[%c0_11, %c0_12] : memref<16x128xf32, #tpu.memory_space<vmem>>, vector<16x128xf32>
    tpu.vector_store %arg4[%c0_11, %c0_12], %23 {strides = array<i32>} : memref<16x128xf32, #tpu.memory_space<vmem>>, vector<16x128xf32>,
    return
  }
  func.func @transform_0(%arg0: i32) -> (i32, i32) {
    %c0_i32 = arith.constant 0 : i32
    %c0_i32_0 = arith.constant 0 : i32
    return %arg0, %c0_i32 : i32, i32
  }
  func.func @transform_1(%arg0: i32) -> (i32, i32) {
    %c0_i32 = arith.constant 0 : i32
    %c0_i32_0 = arith.constant 0 : i32
    %c0_i32_1 = arith.constant 0 : i32
    return %c0_i32, %c0_i32_0 : i32, i32
  }
  func.func @transform_2(%arg0: i32) -> (i32, i32) {
    %c0_i32 = arith.constant 0 : i32
    %c0_i32_0 = arith.constant 0 : i32
    %c0_i32_1 = arith.constant 0 : i32
    return %c0_i32, %c0_i32_0 : i32, i32
  }
  func.func @transform_3(%arg0: i32) -> (i32, i32) {
    %c0_i32 = arith.constant 0 : i32
    %c0_i32_0 = arith.constant 0 : i32
    return %arg0, %c0_i32 : i32, i32
  }
}

</mosaic_0001>

<llo_original>
// kernel: dqn_forward.1
$region0: #{dqn_forward.1}
  #allocation0 [shape = 'u32[]', space=smem, size = 0x4, offset = 0x4, fixed_abs, tag = 'smem constant byte address 0x4 - core index']
  #allocation1 [shape = 'u32[144,128]{1,0:T(1,128)}', space=vmem, size = 0x12000, scoped, tag = 'internal scratch']
  %s0 = inlined_call_operand.vmem [shape: f32[16,32], index: 0, kind: input, shape index: {}]
  %s1 = inlined_call_operand.hbm [shape: bf16[288,128], index: 1, kind: input, shape index: {}]
  %s2 = inlined_call_operand.vmem [shape: f32[3,128], index: 2, kind: input, shape index: {}]
  %s3 = inlined_call_operand.vmem [shape: f32[16,128], index: 3, kind: output, shape index: {}]
  %s4 = sld [smem:[#allocation0]]
  $region26: #{dqn_forward.1} parent=0
    _
  %s6 = ssub.s32 1, %s4
  %s7 = scalar_select 0, %s6, %s4
  $region1: #{dqn_forward.1} parent=0
    #allocation2 [shape = 'u8[73728]{0}', space=vmem, size = 0x12000, scoped, tag = 'input window, operand 1, single buffered']
    #allocation3 [shape = 's32[1]{0}', space=sflag, size = 0x4, scoped, tag = 'scoped memory for dqn_forward.1']
    %8 = vsyncpa [#allocation3], 0
    // Predicated region
    $region2: #{dqn_forward.1} parent=1 // pred_check
      _
    $region3: #{dqn_forward.1} parent=1 // pred_check_branch
      %10 = sbr.rel (0) target = $region5
    $region4: #{dqn_forward.1} parent=1 // pred_region
      _
    $region5: #{dqn_forward.1} parent=1 // pred_fallthru
      _
    // Predicated region
    $region6: #{dqn_forward.1} parent=1 // pred_check
      _
    $region7: #{dqn_forward.1} parent=1 // pred_check_branch
      %12 = sbr.rel (0) target = $region9
    $region8: #{dqn_forward.1} parent=1 // pred_region
      %s14 = ssub.s32 2304, 2304
      %15 = vsyncadd [#allocation3], %s14
      %s16 = sshll.u32 [#allocation2], 4
      %s17 = int_to_ptr.vmem [resolvable:$true] %s16
      %22 = dma.hbm_to_vmem [thread:$0]  %s1, 2304, %s17, [#allocation3], 64, 64, 4
    $region9: #{dqn_forward.1} parent=1 // pred_fallthru
      _
    // Predicated region
    $region10: #{dqn_forward.1} parent=1 // pred_check
      _
    $region11: #{dqn_forward.1} parent=1 // pred_check_branch
      %24 = sbr.rel (0) target = $region13
    $region12: #{dqn_forward.1} parent=1 // pred_region
      _
    $region13: #{dqn_forward.1} parent=1 // pred_fallthru
      _
    // Predicated region
    $region14: #{dqn_forward.1} parent=1 // pred_check
      _
    $region15: #{dqn_forward.1} parent=1 // pred_check_branch
      %26 = sbr.rel (0) target = $region17
    $region16: #{dqn_forward.1} parent=1 // pred_region
      %27 = dma.done [#allocation3], 2304
    $region17: #{dqn_forward.1} parent=1 // pred_fallthru
      _
    %v29 = vld [vmem:[%s0] sm:$0xff]
    %v30 = vld [vmem:[%s0 + $0x8] sm:$0xff]
    %v31 = vpack.c.bf16 %v30, %v29
    %v32 = vld [vmem:[#allocation2] sm:$0xf]
    %v33 = vld [vmem:[#allocation2 + $0x4] sm:$0xf]
    %v34 = vld [vmem:[#allocation2 + $0x8] sm:$0xf]
    %v35 = vld [vmem:[#allocation2 + $0xc] sm:$0xf]
    %v36 = vld [vmem:[#allocation2 + $0x10] sm:$0xf]
    %v37 = vld [vmem:[#allocation2 + $0x14] sm:$0xf]
    %v38 = vld [vmem:[#allocation2 + $0x18] sm:$0xf]
    %v39 = vld [vmem:[#allocation2 + $0x1c] sm:$0xf]
    %v40 = vld [vmem:[#allocation2 + $0x20] sm:$0xf]
    %v41 = vld [vmem:[#allocation2 + $0x24] sm:$0xf]
    %v42 = vld [vmem:[#allocation2 + $0x28] sm:$0xf]
    %v43 = vld [vmem:[#allocation2 + $0x2c] sm:$0xf]
    %v44 = vld [vmem:[#allocation2 + $0x30] sm:$0xf]
    %v45 = vld [vmem:[#allocation2 + $0x34] sm:$0xf]
    %v46 = vld [vmem:[#allocation2 + $0x38] sm:$0xf]
    %v47 = vld [vmem:[#allocation2 + $0x3c] sm:$0xf]
    %v48 = vld [vmem:[#allocation2 + $0x40] sm:$0xf]
    %v49 = vld [vmem:[#allocation2 + $0x44] sm:$0xf]
    %v50 = vld [vmem:[#allocation2 + $0x48] sm:$0xf]
    %v51 = vld [vmem:[#allocation2 + $0x4c] sm:$0xf]
    %v52 = vld [vmem:[#allocation2 + $0x50] sm:$0xf]
    %v53 = vld [vmem:[#allocation2 + $0x54] sm:$0xf]
    %v54 = vld [vmem:[#allocation2 + $0x58] sm:$0xf]
    %v55 = vld [vmem:[#allocation2 + $0x5c] sm:$0xf]
    %v56 = vld [vmem:[#allocation2 + $0x60] sm:$0xf]
    %v57 = vld [vmem:[#allocation2 + $0x64] sm:$0xf]
    %v58 = vld [vmem:[#allocation2 + $0x68] sm:$0xf]
    %v59 = vld [vmem:[#allocation2 + $0x6c] sm:$0xf]
    %v60 = vld [vmem:[#allocation2 + $0x70] sm:$0xf]
    %v61 = vld [vmem:[#allocation2 + $0x74] sm:$0xf]
    %v62 = vld [vmem:[#allocation2 + $0x78] sm:$0xf]
    %v63 = vld [vmem:[#allocation2 + $0x7c] sm:$0xf]
    %v64 = vld [vmem:[#allocation2 + $0x80] sm:$0xf]
    %v65 = vld [vmem:[#allocation2 + $0x84] sm:$0xf]
    %v66 = vld [vmem:[#allocation2 + $0x88] sm:$0xf]
    %v67 = vld [vmem:[#allocation2 + $0x8c] sm:$0xf]
    %v68 = vld [vmem:[%s2] sm:$0x7]
    %v69 = vlaneseq
    %v70 = vshrl.u32 %v69, 7
    %v71 = vsub.s32 0, %v70
    %v72 = vrot.slane %v68, %v71
    %v77 = vunpack.c.l.b16 %v32
    %v78 = vunpack.c.l.b16 %v33
    %v79 = vunpack.c.l.b16 %v34
    %v80 = vunpack.c.l.b16 %v35
    %v81 = vpack.c.b16 %v78, %v77
    %v82 = vpack.c.b16 %v80, %v79
    %vm85 = vcmask 261120
    %v87 = vsel %vm85, %v31, 0
    %89 = vmatprep.subr.bf16.mxu0 0
    %90 = vmatpush1.bf16.msra.mxu0 0
    %91 = vmatprep.subr.bf16.mxu0 0
    %92 = vmatpush1.bf16.msra.mxu0 0
    %93 = vmatprep.subr.bf16.mxu0 0
    %94 = vmatpush1.bf16.msra.mxu0 0
    %95 = vmatprep.subr.bf16.mxu0 0
    %96 = vmatpush1.bf16.msra.mxu0 0
    %97 = vmatprep.subr.bf16.mxu0 0
    %98 = vmatpush1.bf16.msra.mxu0 0
    %99 = vmatprep.subr.bf16.mxu0 0
    %100 = vmatpush1.bf16.msra.mxu0 0
    %101 = vmatprep.subr.bf16.mxu0 0
    %102 = vmatpush1.bf16.msra.mxu0 %v82
    %103 = vmatprep.subr.bf16.mxu0 0
    %104 = vmatpush1.bf16.msra.mxu0 %v81
    %105 = vmatprep.subr.bf16.mxu0 0
    %106 = vmatpush2.bf16.msra.mxu0 0
    %107 = vmatprep.subr.bf16.mxu0 0
    %108 = vmatpush2.bf16.msra.mxu0 0
    %109 = vmatprep.subr.bf16.mxu0 0
    %110 = vmatpush2.bf16.msra.mxu0 0
    %111 = vmatprep.subr.bf16.mxu0 0
    %112 = vmatpush2.bf16.msra.mxu0 0
    %113 = vmatprep.subr.bf16.mxu0 0
    %114 = vmatpush2.bf16.msra.mxu0 0
    %115 = vmatprep.subr.bf16.mxu0 0
    %116 = vmatpush2.bf16.msra.mxu0 0
    %117 = vmatprep.subr.bf16.mxu0 0
    %118 = vmatpush2.bf16.msra.mxu0 0
    %119 = vmatprep.subr.bf16.mxu0 0
    %120 = vmatpush2.bf16.msra.mxu0 0
    %121 = vmatprep.mubr.bf16.mxu0 0
    %122 = vmatmul.mubr.bf16.gmra.mxu0 %v87
    %v123 = vpop.f32.mrf.mxu0
    %v124 = vadd.f32 %v72, %v123
    %v125 = vpop.f32.mrf.mxu0
    %v126 = vpop.f32.mrf.mxu0
    %v127 = vadd.f32 %v72, %v126
    %v128 = vpop.f32.mrf.mxu0
    %129 = vdwg.mxu0
    %v130 = vmax.f32 %v124, 0.0
    %v131 = vmax.f32 %v127, 0.0
    %v132 = vpack.c.bf16 %v131, %v130
    %v133 = vlaneseq
    %v134 = vshrl.u32 %v133, 7
    %v135 = vsub.s32 1, %v134
    %v136 = vrot.slane %v68, %v135
    %v153 = vunpack.c.l.b16 %v36
    %v154 = vunpack.c.l.b16 %v37
    %v155 = vunpack.c.l.b16 %v38
    %v156 = vunpack.c.l.b16 %v39
    %v157 = vunpack.c.l.b16 %v40
    %v158 = vunpack.c.l.b16 %v41
    %v159 = vunpack.c.l.b16 %v42
    %v160 = vunpack.c.l.b16 %v43
    %v161 = vunpack.c.l.b16 %v44
    %v162 = vunpack.c.l.b16 %v45
    %v163 = vunpack.c.l.b16 %v46
    %v164 = vunpack.c.l.b16 %v47
    %v165 = vunpack.c.l.b16 %v48
    %v166 = vunpack.c.l.b16 %v49
    %v167 = vunpack.c.l.b16 %v50
    %v168 = vunpack.c.l.b16 %v51
    %v169 = vpack.c.b16 %v154, %v153
    %v170 = vpack.c.b16 %v156, %v155
    %v171 = vpack.c.b16 %v158, %v157
    %v172 = vpack.c.b16 %v160, %v159
    %v173 = vpack.c.b16 %v162, %v161
    %v174 = vpack.c.b16 %v164, %v163
    %v175 = vpack.c.b16 %v166, %v165
    %v176 = vpack.c.b16 %v168, %v167
    %185 = vmatprep.subr.bf16.mxu0 0
    %186 = vmatpush1.bf16.msra.mxu0 %v176
    %187 = vmatprep.subr.bf16.mxu0 0
    %188 = vmatpush1.bf16.msra.mxu0 %v175
    %189 = vmatprep.subr.bf16.mxu0 0
    %190 = vmatpush1.bf16.msra.mxu0 %v174
    %191 = vmatprep.subr.bf16.mxu0 0
    %192 = vmatpush1.bf16.msra.mxu0 %v173
    %193 = vmatprep.subr.bf16.mxu0 0
    %194 = vmatpush1.bf16.msra.mxu0 %v172
    %195 = vmatprep.subr.bf16.mxu0 0
    %196 = vmatpush1.bf16.msra.mxu0 %v171
    %197 = vmatprep.subr.bf16.mxu0 0
    %198 = vmatpush1.bf16.msra.mxu0 %v170
    %199 = vmatprep.subr.bf16.mxu0 0
    %200 = vmatpush1.bf16.msra.mxu0 %v169
    %201 = vmatprep.subr.bf16.mxu0 0
    %202 = vmatpush2.bf16.msra.mxu0 0
    %203 = vmatprep.subr.bf16.mxu0 0
    %204 = vmatpush2.bf16.msra.mxu0 0
    %205 = vmatprep.subr.bf16.mxu0 0
    %206 = vmatpush2.bf16.msra.mxu0 0
    %207 = vmatprep.subr.bf16.mxu0 0
    %208 = vmatpush2.bf16.msra.mxu0 0
    %209 = vmatprep.subr.bf16.mxu0 0
    %210 = vmatpush2.bf16.msra.mxu0 0
    %211 = vmatprep.subr.bf16.mxu0 0
    %212 = vmatpush2.bf16.msra.mxu0 0
    %213 = vmatprep.subr.bf16.mxu0 0
    %214 = vmatpush2.bf16.msra.mxu0 0
    %215 = vmatprep.subr.bf16.mxu0 0
    %216 = vmatpush2.bf16.msra.mxu0 0
    %217 = vmatprep.mubr.bf16.mxu0 0
    %218 = vmatmul.mubr.bf16.gmra.mxu0 %v132
    %v219 = vpop.f32.mrf.mxu0
    %v220 = vadd.f32 %v136, %v219
    %v221 = vpop.f32.mrf.mxu0
    %v222 = vpop.f32.mrf.mxu0
    %v223 = vadd.f32 %v136, %v222
    %v224 = vpop.f32.mrf.mxu0
    %225 = vdwg.mxu0
    %v226 = vmax.f32 %v220, 0.0
    %v227 = vmax.f32 %v223, 0.0
    %v228 = vpack.c.bf16 %v227, %v226
    %v229 = vlaneseq
    %v230 = vshrl.u32 %v229, 7
    %v231 = vsub.s32 2, %v230
    %v232 = vrot.slane %v68, %v231
    %v249 = vunpack.c.l.b16 %v52
    %v250 = vunpack.c.l.b16 %v53
    %v251 = vunpack.c.l.b16 %v54
    %v252 = vunpack.c.l.b16 %v55
    %v253 = vunpack.c.l.b16 %v56
    %v254 = vunpack.c.l.b16 %v57
    %v255 = vunpack.c.l.b16 %v58
    %v256 = vunpack.c.l.b16 %v59
    %v257 = vunpack.c.l.b16 %v60
    %v258 = vunpack.c.l.b16 %v61
    %v259 = vunpack.c.l.b16 %v62
    %v260 = vunpack.c.l.b16 %v63
    %v261 = vunpack.c.l.b16 %v64
    %v262 = vunpack.c.l.b16 %v65
    %v263 = vunpack.c.l.b16 %v66
    %v264 = vunpack.c.l.b16 %v67
    %v265 = vpack.c.b16 %v250, %v249
    %v266 = vpack.c.b16 %v252, %v251
    %v267 = vpack.c.b16 %v254, %v253
    %v268 = vpack.c.b16 %v256, %v255
    %v269 = vpack.c.b16 %v258, %v257
    %v270 = vpack.c.b16 %v260, %v259
    %v271 = vpack.c.b16 %v262, %v261
    %v272 = vpack.c.b16 %v264, %v263
    %281 = vmatprep.subr.bf16.mxu0 0
    %282 = vmatpush1.bf16.msra.mxu0 %v272
    %283 = vmatprep.subr.bf16.mxu0 0
    %284 = vmatpush1.bf16.msra.mxu0 %v271
    %285 = vmatprep.subr.bf16.mxu0 0
    %286 = vmatpush1.bf16.msra.mxu0 %v270
    %287 = vmatprep.subr.bf16.mxu0 0
    %288 = vmatpush1.bf16.msra.mxu0 %v269
    %289 = vmatprep.subr.bf16.mxu0 0
    %290 = vmatpush1.bf16.msra.mxu0 %v268
    %291 = vmatprep.subr.bf16.mxu0 0
    %292 = vmatpush1.bf16.msra.mxu0 %v267
    %293 = vmatprep.subr.bf16.mxu0 0
    %294 = vmatpush1.bf16.msra.mxu0 %v266
    %295 = vmatprep.subr.bf16.mxu0 0
    %296 = vmatpush1.bf16.msra.mxu0 %v265
    %297 = vmatprep.subr.bf16.mxu0 0
    %298 = vmatpush2.bf16.msra.mxu0 0
    %299 = vmatprep.subr.bf16.mxu0 0
    %300 = vmatpush2.bf16.msra.mxu0 0
    %301 = vmatprep.subr.bf16.mxu0 0
    %302 = vmatpush2.bf16.msra.mxu0 0
    %303 = vmatprep.subr.bf16.mxu0 0
    %304 = vmatpush2.bf16.msra.mxu0 0
    %305 = vmatprep.subr.bf16.mxu0 0
    %306 = vmatpush2.bf16.msra.mxu0 0
    %307 = vmatprep.subr.bf16.mxu0 0
    %308 = vmatpush2.bf16.msra.mxu0 0
    %309 = vmatprep.subr.bf16.mxu0 0
    %310 = vmatpush2.bf16.msra.mxu0 0
    %311 = vmatprep.subr.bf16.mxu0 0
    %312 = vmatpush2.bf16.msra.mxu0 0
    %313 = vmatprep.mubr.bf16.mxu0 0
    %314 = vmatmul.mubr.bf16.gmra.mxu0 %v228
    %v315 = vpop.f32.mrf.mxu0
    %v316 = vadd.f32 %v232, %v315
    %v317 = vpop.f32.mrf.mxu0
    %v318 = vpop.f32.mrf.mxu0
    %v319 = vadd.f32 %v232, %v318
    %v320 = vpop.f32.mrf.mxu0
    %321 = vdwg.mxu0
    %322 = vst [vmem:[%s3] sm:$0xff] %v316
    %323 = vst [vmem:[%s3 + $0x8] sm:$0xff] %v319
    // Predicated region
    $region18: #{dqn_forward.1} parent=1 // pred_check
      _
    $region19: #{dqn_forward.1} parent=1 // pred_check_branch
      %325 = sbr.rel (0) target = $region21
    $region20: #{dqn_forward.1} parent=1 // pred_region
      _
    $region21: #{dqn_forward.1} parent=1 // pred_fallthru
      _
    // Predicated region
    $region22: #{dqn_forward.1} parent=1 // pred_check
      _
    $region23: #{dqn_forward.1} parent=1 // pred_check_branch
      %327 = sbr.rel (0) target = $region25
    $region24: #{dqn_forward.1} parent=1 // pred_region
      _
    $region25: #{dqn_forward.1} parent=1 // pred_fallthru
      _
    %328 = vsyncpa [#allocation3], 1

</llo_original>
